<compile_context>
chip_gen: v7x
topology: tpu7x:2x2x1
jax: 0.10.0
libtpu: 0.0.40
codegen_flags: <defaults>
</compile_context>

<pallas_src>
import jax
import jax.numpy as jnp
from jax import lax
from jax.experimental import pallas as pl
from jax.experimental.pallas import tpu as pltpu


def _layernorm_kernel(x_ref, w_ref, b_ref, o_ref):
    # x_ref : (tile_m, C) rows to normalize
    # w_ref : (1, C) scale       (resident across the whole grid)
    # b_ref : (1, C) bias        (resident across the whole grid)
    # o_ref : (tile_m, C)
    x = x_ref[...].astype(jnp.float32)                      # narrow DMA, wide math
    mu = jnp.mean(x, axis=-1, keepdims=True)                # XLU row reduction
    xc = x - mu
    var = jnp.mean(xc * xc, axis=-1, keepdims=True)         # biased variance
    inv = lax.rsqrt(var + 1e-5)                             # EUP rsqrt (free slot)
    y = xc * inv * w_ref[...] + b_ref[...]
    o_ref[...] = y.astype(o_ref.dtype)


def _default_block_rows():
    """Generation-aware row-tile target (bounded by scoped-VMEM defaults)."""
    try:
        kind = jax.devices()[0].device_kind.lower()
    except Exception:
        return 4096
    if "v5 lite" in kind or "v5e" in kind or "v5litepod" in kind:
        return 2048            # 16 MiB scoped-VMEM default on v5e
    if "v7" in kind:
        return 8192            # richer HBM BW; 16 MiB << 32 MiB scoped default
    return 4096


def _pick_tile_m(M, dtype, target_rows, min_grid=4):
    """Sublane-aligned row tile; prefer an exact divisor of M (no padding /
    no masked boundary stores); keep >= min_grid steps for the parallel axis."""
    itemsize = jnp.dtype(dtype).itemsize
    sub = 8 * max(1, 4 // itemsize)          # 8 f32, 16 bf16, 32 int8/fp8
    if M <= sub:
        return M                             # single block == full row extent
    cap = max(sub, (M // min_grid) // sub * sub)
    tile = max(sub, min(int(target_rows), cap) // sub * sub)
    t = tile
    while t >= sub:                          # trace-time only; cheap
        if M % t == 0:
            return t
        t -= sub
    # No aligned divisor: fall back to Pallas boundary-block masking
    # (rows are independent; masked stores drop the garbage tail rows).
    return tile


def layernorm_with_bias(x, weight, bias, *, block_rows=None):
    """x: (..., C); weight, bias: (C,). Matches PyTorch WithBias_LayerNorm."""
    orig_shape = x.shape
    C = orig_shape[-1]
    M = 1
    for d in orig_shape[:-1]:
        M *= d
    x2 = x.reshape(M, C)                     # contiguous collapse: free in XLA

    if block_rows is None:
        block_rows = _default_block_rows()
    tile_m = _pick_tile_m(M, x.dtype, block_rows)
    num_tiles = pl.cdiv(M, tile_m)

    w2 = weight.reshape(1, C).astype(jnp.float32)
    b2 = bias.reshape(1, C).astype(jnp.float32)

    out = pl.pallas_call(
        _layernorm_kernel,
        out_shape=jax.ShapeDtypeStruct((M, C), x.dtype),
        grid=(num_tiles,),
        in_specs=[
            pl.BlockSpec((tile_m, C), lambda i: (i, 0)),   # x rows
            pl.BlockSpec((1, C), lambda i: (0, 0)),        # weight (resident)
            pl.BlockSpec((1, C), lambda i: (0, 0)),        # bias   (resident)
        ],
        out_specs=pl.BlockSpec((tile_m, C), lambda i: (i, 0)),
        compiler_params=pltpu.CompilerParams(
            dimension_semantics=("parallel",)),
    )(x2, w2, b2)

    return out.reshape(orig_shape)


def layernorm_reference(x, weight, bias):
    """Pure-JAX reference matching the PyTorch module (unbiased=False var)."""
    xf = x.astype(jnp.float32)
    mu = jnp.mean(xf, axis=-1, keepdims=True)
    var = jnp.mean((xf - mu) ** 2, axis=-1, keepdims=True)
    y = (xf - mu) / jnp.sqrt(var + 1e-5) * weight + bias
    return y.astype(x.dtype)


if __name__ == "__main__":
    key = jax.random.PRNGKey(0)
    kx, kw, kb, kx2 = jax.random.split(key, 4)

    # Small demo shape: (B, seq, hidden), hidden = normalized_shape = 128.
    B, N, C = 2, 256, 128
    x = jax.random.normal(kx, (B, N, C), jnp.float32)
    weight = 1.0 + 0.1 * jax.random.normal(kw, (C,), jnp.float32)
    bias = 0.1 * jax.random.normal(kb, (C,), jnp.float32)

    out = jax.block_until_ready(layernorm_with_bias(x, weight, bias))
    ref = jax.block_until_ready(layernorm_reference(x, weight, bias))
    assert out.shape == x.shape, out.shape
    assert jnp.allclose(out, ref, atol=1e-4, rtol=1e-4), (
        float(jnp.max(jnp.abs(out - ref))))

    # Second shape with an "awkward" row count (M = 408) to exercise the
    # divisor-based tile selection on a non-power-of-two leading extent.
    x_b = jax.random.normal(kx2, (3, 17, 8, C), jnp.float32)
    out_b = jax.block_until_ready(layernorm_with_bias(x_b, weight, bias))
    ref_b = jax.block_until_ready(layernorm_reference(x_b, weight, bias))
    assert out_b.shape == x_b.shape, out_b.shape
    assert jnp.allclose(out_b, ref_b, atol=1e-4, rtol=1e-4), (
        float(jnp.max(jnp.abs(out_b - ref_b))))

    print("KERNEL_OK")
</pallas_src>

<mosaic_0001>
module attributes {stable_mosaic.version = 11 : i64} {
  func.func @_layernorm_kernel(%arg0: i32, %arg1: memref<128x128xf32, #tpu.memory_space<vmem>>, %arg2: memref<1x128xf32, #tpu.memory_space<vmem>>, %arg3: memref<1x128xf32, #tpu.memory_space<vmem>>, %arg4: memref<128x128xf32, #tpu.memory_space<vmem>>) attributes {dimension_semantics = [#tpu.dimension_semantics<parallel>], iteration_bounds = array<i64: 4>, scalar_prefetch = 0 : i64, scratch_operands = 0 : i64, tpu.core_type = #tpu.core_type<tc>, window_params = [{transform_indices = @transform_0, window_bounds = array<i64: 128, 128>}, {pipeline_mode = #tpu.pipeline_mode<synchronous>, transform_indices = @transform_1, window_bounds = array<i64: 1, 128>}, {pipeline_mode = #tpu.pipeline_mode<synchronous>, transform_indices = @transform_2, window_bounds = array<i64: 1, 128>}, {transform_indices = @transform_3, window_bounds = array<i64: 128, 128>}]} {
    %c0 = arith.constant 0 : index
    %c0_0 = arith.constant 0 : index
    %0 = vector.load %arg1[%c0, %c0_0] : memref<128x128xf32, #tpu.memory_space<vmem>>, vector<128x128xf32>
    %cst = arith.constant dense<0.000000e+00> : vector<128xf32>
    %1 = vector.multi_reduction <add>, %0, %cst [1] : vector<128x128xf32> to vector<128xf32>
    %2 = vector.shape_cast %1 : vector<128xf32> to vector<128x1xf32>
    %cst_1 = arith.constant 1.280000e+02 : f32
    %3 = vector.broadcast %cst_1 : f32 to vector<128x1xf32>
    %4 = arith.divf %2, %3 : vector<128x1xf32>
    %5 = vector.broadcast %4 : vector<128x1xf32> to vector<128x128xf32>
    %6 = arith.subf %0, %5 : vector<128x128xf32>
    %7 = arith.mulf %6, %6 : vector<128x128xf32>
    %cst_2 = arith.constant dense<0.000000e+00> : vector<128xf32>
    %8 = vector.multi_reduction <add>, %7, %cst_2 [1] : vector<128x128xf32> to vector<128xf32>
    %9 = vector.shape_cast %8 : vector<128xf32> to vector<128x1xf32>
    %cst_3 = arith.constant 1.280000e+02 : f32
    %10 = vector.broadcast %cst_3 : f32 to vector<128x1xf32>
    %11 = arith.divf %9, %10 : vector<128x1xf32>
    %cst_4 = arith.constant 9.99999974E-6 : f32
    %12 = vector.broadcast %cst_4 : f32 to vector<128x1xf32>
    %13 = arith.addf %11, %12 : vector<128x1xf32>
    %14 = math.rsqrt %13 : vector<128x1xf32>
    %15 = vector.broadcast %14 : vector<128x1xf32> to vector<128x128xf32>
    %16 = arith.mulf %6, %15 : vector<128x128xf32>
    %c0_5 = arith.constant 0 : index
    %c0_6 = arith.constant 0 : index
    %17 = vector.load %arg2[%c0_5, %c0_6] : memref<1x128xf32, #tpu.memory_space<vmem>>, vector<1x128xf32>
    %18 = vector.broadcast %17 : vector<1x128xf32> to vector<128x128xf32>
    %19 = arith.mulf %16, %18 : vector<128x128xf32>
    %c0_7 = arith.constant 0 : index
    %c0_8 = arith.constant 0 : index
    %20 = vector.load %arg3[%c0_7, %c0_8] : memref<1x128xf32, #tpu.memory_space<vmem>>, vector<1x128xf32>
    %21 = vector.broadcast %20 : vector<1x128xf32> to vector<128x128xf32>
    %22 = arith.addf %19, %21 : vector<128x128xf32>
    %c0_9 = arith.constant 0 : index
    %c0_10 = arith.constant 0 : index
    %23 = vector.load %arg4[%c0_9, %c0_10] : memref<128x128xf32, #tpu.memory_space<vmem>>, vector<128x128xf32>
    tpu.vector_store %arg4[%c0_9, %c0_10], %22 {strides = array<i32>} : memref<128x128xf32, #tpu.memory_space<vmem>>, vector<128x128xf32>,
    return
  }
  func.func @transform_0(%arg0: i32) -> (i32, i32) {
    %c0_i32 = arith.constant 0 : i32
    %c0_i32_0 = arith.constant 0 : i32
    return %arg0, %c0_i32 : i32, i32
  }
  func.func @transform_1(%arg0: i32) -> (i32, i32) {
    %c0_i32 = arith.constant 0 : i32
    %c0_i32_0 = arith.constant 0 : i32
    %c0_i32_1 = arith.constant 0 : i32
    return %c0_i32, %c0_i32_0 : i32, i32
  }
  func.func @transform_2(%arg0: i32) -> (i32, i32) {
    %c0_i32 = arith.constant 0 : i32
    %c0_i32_0 = arith.constant 0 : i32
    %c0_i32_1 = arith.constant 0 : i32
    return %c0_i32, %c0_i32_0 : i32, i32
  }
  func.func @transform_3(%arg0: i32) -> (i32, i32) {
    %c0_i32 = arith.constant 0 : i32
    %c0_i32_0 = arith.constant 0 : i32
    return %arg0, %c0_i32 : i32, i32
  }
}

</mosaic_0001>

<llo_original>
// kernel: tpu_custom_call.1
$region0: #{tpu_custom_call.1}
  #allocation0 [shape = 'u32[]', space=smem, size = 0x4, offset = 0x4, fixed_abs, tag = 'smem constant byte address 0x4 - core index']
  #allocation1 [shape = 'u32[144,128]{1,0:T(1,128)}', space=vmem, size = 0x12000, scoped, tag = 'internal scratch']
  %s0 = inlined_call_operand.hbm [shape: f32[512,128], index: 0, kind: input, shape index: {}]
  %s1 = inlined_call_operand.vmem [shape: f32[1,128], index: 1, kind: input, shape index: {}]
  %s2 = inlined_call_operand.vmem [shape: f32[1,128], index: 2, kind: input, shape index: {}]
  %s3 = inlined_call_operand.hbm [shape: f32[512,128], index: 3, kind: output, shape index: {}]
  %s4 = sld [smem:[#allocation0]]
  $region49: #{tpu_custom_call.1} parent=0
    _
  %s6 = ssub.s32 1, %s4
  %s7 = scalar_select 0, %s6, %s4
  $region1: #{tpu_custom_call.1} parent=0
    #allocation2 [shape = 'u8[131072]{0}', space=vmem, size = 0x20000, scoped, tag = 'input window, operand 0']
    #allocation3 [shape = 's32[2]{0}', space=sflag, size = 0x8, scoped, tag = 'scoped memory for tpu_custom_call.1']
    #allocation4 [shape = 's32[2]{0}', space=sflag, size = 0x8, scoped, tag = 'scoped memory for tpu_custom_call.1']
    #allocation5 [shape = 'u8[131072]{0}', space=vmem, size = 0x20000, scoped, tag = 'output window, operand 0']
    %8 = vsyncpa [#allocation3], 0
    %s9 = scalar_lea.sflag [#allocation3], 1
    %10 = vsyncpa %s9, 0
    %11 = vsyncpa [#allocation4], 0
    %s12 = scalar_lea.sflag [#allocation4], 1
    %13 = vsyncpa %s12, 0
    loop: start=0, step=1, limit=6
    $region2: #{tpu_custom_call.1} parent=1 // loop_pre_header
      _
    $region3: #{tpu_custom_call.1} parent=1 // loop_header
      %s15 = sphi 0, %s19
      %p16 = scmp.ge.s32.totalorder %s15, 6
      %s25 = sphi 0, %s27
      %s28 = sphi 0, %s25
      %s29 = sphi 0, %s28
      %s45 = sphi 0, %s29
      %s49 = sphi 0, %s49
      %s51 = sphi 0, %s49
      %s52 = sphi 0, %s51
      %s66 = sphi 0, %s52
      %s70 = sphi 0, %s70
      %s72 = sphi 0, %s70
      %s73 = sphi 0, %s72
      %s87 = sphi 0, %s73
      %s93 = sphi 0, %s95
      %s96 = sphi 0, %s93
      %s97 = sphi 0, %s96
      %s113 = sphi 0, %s97
    $region4: #{tpu_custom_call.1} parent=1 // loop_header_branch
      %18 = sbr.rel (%p16) target = $region8
    $region5: #{tpu_custom_call.1} parent=1 // loop_body
      %s20 = ssub.s32 %s15, 1
      %s21 = ssub.s32 %s15, 2
      %s22 = sadd.s32 %s15, 1
      %s23 = ssub.s32 %s15, %s22
      %p24 = scmp.eq.s32.totalorder %s23, 0
      %s26 = sadd.s32 %s25, 1
      %s27 = scalar_select %p24, %s25, %s26
      %p30 = pneg %p24
      %p31 = scmp.eq.s32.totalorder %s15, 3
      %p32 = por %p30, %p31
      %p33 = scmp.ne.s32.totalorder %s25, %s28
      %p34 = scmp.eq.s32.totalorder %s15, 0
      %p35 = por %p33, %p34
      %p36 = scmp.ne.s32.totalorder %s25, %s28
      %p37 = scmp.eq.s32.totalorder %s20, 3
      %p38 = por %p36, %p37
      %p39 = scmp.ne.s32.totalorder %s28, %s29
      %p40 = scmp.eq.s32.totalorder %s20, 0
      %p41 = por %p39, %p40
      %p42 = scmp.ne.s32.totalorder %s28, %s29
      %p43 = scmp.eq.s32.totalorder %s21, 3
      %p44 = por %p42, %p43
      %p46 = scmp.ne.s32.totalorder %s29, %s45
      %p47 = scmp.eq.s32.totalorder %s21, 0
      %p48 = por %p46, %p47
      %s50 = sadd.s32 %s49, 1
      %p53 = scmp.eq.s32.totalorder %s15, 3
      %p54 = scmp.ne.s32.totalorder %s49, %s51
      %p55 = scmp.eq.s32.totalorder %s15, 0
      %p56 = por %p54, %p55
      %p57 = scmp.ne.s32.totalorder %s49, %s51
      %p58 = scmp.eq.s32.totalorder %s20, 3
      %p59 = por %p57, %p58
      %p60 = scmp.ne.s32.totalorder %s51, %s52
      %p61 = scmp.eq.s32.totalorder %s20, 0
      %p62 = por %p60, %p61
      %p63 = scmp.ne.s32.totalorder %s51, %s52
      %p64 = scmp.eq.s32.totalorder %s21, 3
      %p65 = por %p63, %p64
      %p67 = scmp.ne.s32.totalorder %s52, %s66
      %p68 = scmp.eq.s32.totalorder %s21, 0
      %p69 = por %p67, %p68
      %s71 = sadd.s32 %s70, 1
      %p74 = scmp.eq.s32.totalorder %s15, 3
      %p75 = scmp.ne.s32.totalorder %s70, %s72
      %p76 = scmp.eq.s32.totalorder %s15, 0
      %p77 = por %p75, %p76
      %p78 = scmp.ne.s32.totalorder %s70, %s72
      %p79 = scmp.eq.s32.totalorder %s20, 3
      %p80 = por %p78, %p79
      %p81 = scmp.ne.s32.totalorder %s72, %s73
      %p82 = scmp.eq.s32.totalorder %s20, 0
      %p83 = por %p81, %p82
      %p84 = scmp.ne.s32.totalorder %s72, %s73
      %p85 = scmp.eq.s32.totalorder %s21, 3
      %p86 = por %p84, %p85
      %p88 = scmp.ne.s32.totalorder %s73, %s87
      %p89 = scmp.eq.s32.totalorder %s21, 0
      %p90 = por %p88, %p89
      %s91 = ssub.s32 %s15, %s22
      %p92 = scmp.eq.s32.totalorder %s91, 0
      %s94 = sadd.s32 %s93, 1
      %s95 = scalar_select %p92, %s93, %s94
      %p98 = pneg %p92
      %p99 = scmp.eq.s32.totalorder %s15, 3
      %p100 = por %p98, %p99
      %p101 = scmp.ne.s32.totalorder %s93, %s96
      %p102 = scmp.eq.s32.totalorder %s15, 0
      %p103 = por %p101, %p102
      %p104 = scmp.ne.s32.totalorder %s93, %s96
      %p105 = scmp.eq.s32.totalorder %s20, 3
      %p106 = por %p104, %p105
      %p107 = scmp.ne.s32.totalorder %s96, %s97
      %p108 = scmp.eq.s32.totalorder %s20, 0
      %p109 = por %p107, %p108
      %p110 = scmp.ne.s32.totalorder %s96, %s97
      %p111 = scmp.eq.s32.totalorder %s21, 3
      %p112 = por %p110, %p111
      %p114 = scmp.ne.s32.totalorder %s97, %s113
      %p115 = scmp.eq.s32.totalorder %s21, 0
      %p116 = por %p114, %p115
      %p117 = scmp.le.s32.totalorder 1, %s15
      %p118 = scmp.lt.s32.totalorder %s15, 5
      %p119 = pnand %p117, %p118
      %p120 = pneg %p119
      // Predicated region
      $region9: #{tpu_custom_call.1} parent=5 // pred_check
        _
      $region10: #{tpu_custom_call.1} parent=5 // pred_check_branch
        %122 = sbr.rel (%p119) target = $region12
      $region11: #{tpu_custom_call.1} parent=5 // pred_region
        %s123 = ssub.s32 %s15, 1
        // Predicated region
        $region13: #{tpu_custom_call.1} parent=11 // pred_check
          %p124 = pneg %p62
        $region14: #{tpu_custom_call.1} parent=11 // pred_check_branch
          %126 = sbr.rel (%p124) target = $region16
        $region15: #{tpu_custom_call.1} parent=11 // pred_region
          _
        $region16: #{tpu_custom_call.1} parent=11 // pred_fallthru
          _
        // Predicated region
        $region17: #{tpu_custom_call.1} parent=11 // pred_check
          %p127 = pneg %p83
        $region18: #{tpu_custom_call.1} parent=11 // pred_check_branch
          %129 = sbr.rel (%p127) target = $region20
        $region19: #{tpu_custom_call.1} parent=11 // pred_region
          _
        $region20: #{tpu_custom_call.1} parent=11 // pred_fallthru
          _
      $region12: #{tpu_custom_call.1} parent=5 // pred_fallthru
        _
      %p130 = scmp.lt.s32.totalorder %s15, 4
      // Predicated region
      $region21: #{tpu_custom_call.1} parent=5 // pred_check
        %p131 = pneg %p130
      $region22: #{tpu_custom_call.1} parent=5 // pred_check_branch
        %133 = sbr.rel (%p131) target = $region24
      $region23: #{tpu_custom_call.1} parent=5 // pred_region
        // Predicated region
        $region25: #{tpu_custom_call.1} parent=23 // pred_check
          %p134 = pneg %p35
        $region26: #{tpu_custom_call.1} parent=23 // pred_check_branch
          %136 = sbr.rel (%p134) target = $region28
        $region27: #{tpu_custom_call.1} parent=23 // pred_region
          %s137 = sand.u32 %s25, 1
          %s138 = scalar_lea.sflag [#allocation3], %s137
          %s139 = sand.u32 %s25, 1
          %s140 = smul.addr %s139, 128
          %s141 = scalar_lea.vmem [#allocation2], %s140
          %s142 = smul.u32 16, %s15
          %s144 = ssub.s32 2048, 2048
          %145 = vsyncadd %s138, %s144
          %s146 = smul.addr %s142, 128
          %s147 = scalar_lea.hbm %s0, %s146
          %s148 = sshll.u32 %s141, 4
          %s149 = int_to_ptr.vmem [resolvable:$true] %s148
          %154 = dma.hbm_to_vmem [thread:$0]  %s147, 2048, %s149, %s138, 128, 128, 8
        $region28: #{tpu_custom_call.1} parent=23 // pred_fallthru
          _
      $region24: #{tpu_custom_call.1} parent=5 // pred_fallthru
        _
      %p155 = scmp.le.s32.totalorder 1, %s15
      %p156 = scmp.lt.s32.totalorder %s15, 5
      %p157 = pnand %p155, %p156
      %p158 = pneg %p157
      // Predicated region
      $region29: #{tpu_custom_call.1} parent=5 // pred_check
        _
      $region30: #{tpu_custom_call.1} parent=5 // pred_check_branch
        %160 = sbr.rel (%p157) target = $region32
      $region31: #{tpu_custom_call.1} parent=5 // pred_region
        %s161 = ssub.s32 %s15, 1
        %s162 = sand.u32 %s28, 1
        %s163 = scalar_lea.sflag [#allocation3], %s162
        %s164 = sand.u32 %s28, 1
        %s165 = smul.addr %s164, 128
        %s166 = scalar_lea.vmem [#allocation2], %s165
        // Predicated region
        $region33: #{tpu_custom_call.1} parent=31 // pred_check
          %p167 = pneg %p41
        $region34: #{tpu_custom_call.1} parent=31 // pred_check_branch
          %169 = sbr.rel (%p167) target = $region36
        $region35: #{tpu_custom_call.1} parent=31 // pred_region
          %170 = dma.done %s163, 2048
        $region36: #{tpu_custom_call.1} parent=31 // pred_fallthru
          _
        %s171 = sand.u32 %s28, 1
        %s172 = scalar_lea.sflag [#allocation3], %s171
        %s173 = sand.u32 %s28, 1
        %s174 = smul.addr %s173, 128
        %s175 = scalar_lea.vmem [#allocation2], %s174
        %p176 = pneg %p41
        %p177 = pneg %p38
        %p178 = pneg %p62
        %p179 = pneg %p59
        %p180 = pneg %p83
        %p181 = pneg %p80
        %p182 = pneg %p109
        %p183 = pneg %p106
        %s184 = sand.u32 %s96, 1
        %s185 = scalar_lea.sflag [#allocation4], %s184
        %s186 = sand.u32 %s96, 1
        %s187 = smul.addr %s186, 128
        %s188 = scalar_lea.vmem [#allocation5], %s187
        %s189 = smul.u32 16, %s20
        %s190 = smul.u32 16, %s20
        %v191 = vld [vmem:[%s166] sm:$0xff]
        %v192 = vld [vmem:[%s166 + $0x8] sm:$0xff]
        %v193 = vld [vmem:[%s166 + $0x10] sm:$0xff]
        %v194 = vld [vmem:[%s166 + $0x18] sm:$0xff]
        %v195 = vld [vmem:[%s166 + $0x20] sm:$0xff]
        %v196 = vld [vmem:[%s166 + $0x28] sm:$0xff]
        %v197 = vld [vmem:[%s166 + $0x30] sm:$0xff]
        %v198 = vld [vmem:[%s166 + $0x38] sm:$0xff]
        %v199 = vld [vmem:[%s166 + $0x40] sm:$0xff]
        %v200 = vld [vmem:[%s166 + $0x48] sm:$0xff]
        %v201 = vld [vmem:[%s166 + $0x50] sm:$0xff]
        %v202 = vld [vmem:[%s166 + $0x58] sm:$0xff]
        %v203 = vld [vmem:[%s166 + $0x60] sm:$0xff]
        %v204 = vld [vmem:[%s166 + $0x68] sm:$0xff]
        %v205 = vld [vmem:[%s166 + $0x70] sm:$0xff]
        %v206 = vld [vmem:[%s166 + $0x78] sm:$0xff]
        %207 = vadd.xlane.f32.xlu0 %v191
        %v208 = vpop.xlane.xlu0 %207
        %209 = vadd.xlane.f32.xlu0 %v192
        %v210 = vpop.xlane.xlu0 %209
        %211 = vadd.xlane.f32.xlu0 %v193
        %v212 = vpop.xlane.xlu0 %211
        %213 = vadd.xlane.f32.xlu0 %v194
        %v214 = vpop.xlane.xlu0 %213
        %215 = vadd.xlane.f32.xlu0 %v195
        %v216 = vpop.xlane.xlu0 %215
        %217 = vadd.xlane.f32.xlu0 %v196
        %v218 = vpop.xlane.xlu0 %217
        %219 = vadd.xlane.f32.xlu0 %v197
        %v220 = vpop.xlane.xlu0 %219
        %221 = vadd.xlane.f32.xlu0 %v198
        %v222 = vpop.xlane.xlu0 %221
        %223 = vadd.xlane.f32.xlu0 %v199
        %v224 = vpop.xlane.xlu0 %223
        %225 = vadd.xlane.f32.xlu0 %v200
        %v226 = vpop.xlane.xlu0 %225
        %227 = vadd.xlane.f32.xlu0 %v201
        %v228 = vpop.xlane.xlu0 %227
        %229 = vadd.xlane.f32.xlu0 %v202
        %v230 = vpop.xlane.xlu0 %229
        %231 = vadd.xlane.f32.xlu0 %v203
        %v232 = vpop.xlane.xlu0 %231
        %233 = vadd.xlane.f32.xlu0 %v204
        %v234 = vpop.xlane.xlu0 %233
        %235 = vadd.xlane.f32.xlu0 %v205
        %v236 = vpop.xlane.xlu0 %235
        %237 = vadd.xlane.f32.xlu0 %v206
        %v238 = vpop.xlane.xlu0 %237
        %v239 = vrcp.pop 128.0
        %v240 = vmul.f32 %v208, %v239
        %v241 = vmul.f32 %v210, %v239
        %v242 = vmul.f32 %v212, %v239
        %v243 = vmul.f32 %v214, %v239
        %v244 = vmul.f32 %v216, %v239
        %v245 = vmul.f32 %v218, %v239
        %v246 = vmul.f32 %v220, %v239
        %v247 = vmul.f32 %v222, %v239
        %v248 = vmul.f32 %v224, %v239
        %v249 = vmul.f32 %v226, %v239
        %v250 = vmul.f32 %v228, %v239
        %v251 = vmul.f32 %v230, %v239
        %v252 = vmul.f32 %v232, %v239
        %v253 = vmul.f32 %v234, %v239
        %v254 = vmul.f32 %v236, %v239
        %v255 = vmul.f32 %v238, %v239
        %v256 = vsub.f32 %v191, %v240
        %v257 = vsub.f32 %v192, %v241
        %v258 = vsub.f32 %v193, %v242
        %v259 = vsub.f32 %v194, %v243
        %v260 = vsub.f32 %v195, %v244
        %v261 = vsub.f32 %v196, %v245
        %v262 = vsub.f32 %v197, %v246
        %v263 = vsub.f32 %v198, %v247
        %v264 = vsub.f32 %v199, %v248
        %v265 = vsub.f32 %v200, %v249
        %v266 = vsub.f32 %v201, %v250
        %v267 = vsub.f32 %v202, %v251
        %v268 = vsub.f32 %v203, %v252
        %v269 = vsub.f32 %v204, %v253
        %v270 = vsub.f32 %v205, %v254
        %v271 = vsub.f32 %v206, %v255
        %v272 = vmul.f32 %v256, %v256
        %v273 = vmul.f32 %v257, %v257
        %v274 = vmul.f32 %v258, %v258
        %v275 = vmul.f32 %v259, %v259
        %v276 = vmul.f32 %v260, %v260
        %v277 = vmul.f32 %v261, %v261
        %v278 = vmul.f32 %v262, %v262
        %v279 = vmul.f32 %v263, %v263
        %v280 = vmul.f32 %v264, %v264
        %v281 = vmul.f32 %v265, %v265
        %v282 = vmul.f32 %v266, %v266
        %v283 = vmul.f32 %v267, %v267
        %v284 = vmul.f32 %v268, %v268
        %v285 = vmul.f32 %v269, %v269
        %v286 = vmul.f32 %v270, %v270
        %v287 = vmul.f32 %v271, %v271
        %288 = vadd.xlane.f32.xlu0 %v272
        %v289 = vpop.xlane.xlu0 %288
        %290 = vadd.xlane.f32.xlu0 %v273
        %v291 = vpop.xlane.xlu0 %290
        %292 = vadd.xlane.f32.xlu0 %v274
        %v293 = vpop.xlane.xlu0 %292
        %294 = vadd.xlane.f32.xlu0 %v275
        %v295 = vpop.xlane.xlu0 %294
        %296 = vadd.xlane.f32.xlu0 %v276
        %v297 = vpop.xlane.xlu0 %296
        %298 = vadd.xlane.f32.xlu0 %v277
        %v299 = vpop.xlane.xlu0 %298
        %300 = vadd.xlane.f32.xlu0 %v278
        %v301 = vpop.xlane.xlu0 %300
        %302 = vadd.xlane.f32.xlu0 %v279
        %v303 = vpop.xlane.xlu0 %302
        %304 = vadd.xlane.f32.xlu0 %v280
        %v305 = vpop.xlane.xlu0 %304
        %306 = vadd.xlane.f32.xlu0 %v281
        %v307 = vpop.xlane.xlu0 %306
        %308 = vadd.xlane.f32.xlu0 %v282
        %v309 = vpop.xlane.xlu0 %308
        %310 = vadd.xlane.f32.xlu0 %v283
        %v311 = vpop.xlane.xlu0 %310
        %312 = vadd.xlane.f32.xlu0 %v284
        %v313 = vpop.xlane.xlu0 %312
        %314 = vadd.xlane.f32.xlu0 %v285
        %v315 = vpop.xlane.xlu0 %314
        %316 = vadd.xlane.f32.xlu0 %v286
        %v317 = vpop.xlane.xlu0 %316
        %318 = vadd.xlane.f32.xlu0 %v287
        %v319 = vpop.xlane.xlu0 %318
        %v320 = vmul.f32 %v289, %v239
        %v321 = vmul.f32 %v291, %v239
        %v322 = vmul.f32 %v293, %v239
        %v323 = vmul.f32 %v295, %v239
        %v324 = vmul.f32 %v297, %v239
        %v325 = vmul.f32 %v299, %v239
        %v326 = vmul.f32 %v301, %v239
        %v327 = vmul.f32 %v303, %v239
        %v328 = vmul.f32 %v305, %v239
        %v329 = vmul.f32 %v307, %v239
        %v330 = vmul.f32 %v309, %v239
        %v331 = vmul.f32 %v311, %v239
        %v332 = vmul.f32 %v313, %v239
        %v333 = vmul.f32 %v315, %v239
        %v334 = vmul.f32 %v317, %v239
        %v335 = vmul.f32 %v319, %v239
        %v336 = vadd.f32 %v320, 1e-05
        %v337 = vadd.f32 %v321, 1e-05
        %v338 = vadd.f32 %v322, 1e-05
        %v339 = vadd.f32 %v323, 1e-05
        %v340 = vadd.f32 %v324, 1e-05
        %v341 = vadd.f32 %v325, 1e-05
        %v342 = vadd.f32 %v326, 1e-05
        %v343 = vadd.f32 %v327, 1e-05
        %v344 = vadd.f32 %v328, 1e-05
        %v345 = vadd.f32 %v329, 1e-05
        %v346 = vadd.f32 %v330, 1e-05
        %v347 = vadd.f32 %v331, 1e-05
        %v348 = vadd.f32 %v332, 1e-05
        %v349 = vadd.f32 %v333, 1e-05
        %v350 = vadd.f32 %v334, 1e-05
        %v351 = vadd.f32 %v335, 1e-05
        %v352 = vrsqrt.pop %v336
        %v353 = vrsqrt.pop %v337
        %v354 = vrsqrt.pop %v338
        %v355 = vrsqrt.pop %v339
        %v356 = vrsqrt.pop %v340
        %v357 = vrsqrt.pop %v341
        %v358 = vrsqrt.pop %v342
        %v359 = vrsqrt.pop %v343
        %v360 = vrsqrt.pop %v344
        %v361 = vrsqrt.pop %v345
        %v362 = vrsqrt.pop %v346
        %v363 = vrsqrt.pop %v347
        %v364 = vrsqrt.pop %v348
        %v365 = vrsqrt.pop %v349
        %v366 = vrsqrt.pop %v350
        %v367 = vrsqrt.pop %v351
        %v368 = vmul.f32 %v256, %v352
        %v369 = vmul.f32 %v257, %v353
        %v370 = vmul.f32 %v258, %v354
        %v371 = vmul.f32 %v259, %v355
        %v372 = vmul.f32 %v260, %v356
        %v373 = vmul.f32 %v261, %v357
        %v374 = vmul.f32 %v262, %v358
        %v375 = vmul.f32 %v263, %v359
        %v376 = vmul.f32 %v264, %v360
        %v377 = vmul.f32 %v265, %v361
        %v378 = vmul.f32 %v266, %v362
        %v379 = vmul.f32 %v267, %v363
        %v380 = vmul.f32 %v268, %v364
        %v381 = vmul.f32 %v269, %v365
        %v382 = vmul.f32 %v270, %v366
        %v383 = vmul.f32 %v271, %v367
        %v384 = vld [vmem:[%s1] sm:$0x1]
        %v386 = vlaneseq
        %v387 = vshrl.u32 %v386, 7
        %v388 = vsub.s32 0, %v387
        %v389 = vrot.slane %v384, %v388
        %v391 = vmul.f32 %v368, %v389
        %v392 = vmul.f32 %v369, %v389
        %v393 = vmul.f32 %v370, %v389
        %v394 = vmul.f32 %v371, %v389
        %v395 = vmul.f32 %v372, %v389
        %v396 = vmul.f32 %v373, %v389
        %v397 = vmul.f32 %v374, %v389
        %v398 = vmul.f32 %v375, %v389
        %v399 = vmul.f32 %v376, %v389
        %v400 = vmul.f32 %v377, %v389
        %v401 = vmul.f32 %v378, %v389
        %v402 = vmul.f32 %v379, %v389
        %v403 = vmul.f32 %v380, %v389
        %v404 = vmul.f32 %v381, %v389
        %v405 = vmul.f32 %v382, %v389
        %v406 = vmul.f32 %v383, %v389
        %v407 = vld [vmem:[%s2] sm:$0x1]
        %v409 = vlaneseq
        %v410 = vshrl.u32 %v409, 7
        %v411 = vsub.s32 0, %v410
        %v412 = vrot.slane %v407, %v411
        %v414 = vadd.f32 %v391, %v412
        %v415 = vadd.f32 %v392, %v412
        %v416 = vadd.f32 %v393, %v412
        %v417 = vadd.f32 %v394, %v412
        %v418 = vadd.f32 %v395, %v412
        %v419 = vadd.f32 %v396, %v412
        %v420 = vadd.f32 %v397, %v412
        %v421 = vadd.f32 %v398, %v412
        %v422 = vadd.f32 %v399, %v412
        %v423 = vadd.f32 %v400, %v412
        %v424 = vadd.f32 %v401, %v412
        %v425 = vadd.f32 %v402, %v412
        %v426 = vadd.f32 %v403, %v412
        %v427 = vadd.f32 %v404, %v412
        %v428 = vadd.f32 %v405, %v412
        %v429 = vadd.f32 %v406, %v412
        %430 = vst [vmem:[%s188] sm:$0xff] %v414
        %431 = vst [vmem:[%s188 + $0x8] sm:$0xff] %v415
        %432 = vst [vmem:[%s188 + $0x10] sm:$0xff] %v416
        %433 = vst [vmem:[%s188 + $0x18] sm:$0xff] %v417
        %434 = vst [vmem:[%s188 + $0x20] sm:$0xff] %v418
        %435 = vst [vmem:[%s188 + $0x28] sm:$0xff] %v419
        %436 = vst [vmem:[%s188 + $0x30] sm:$0xff] %v420
        %437 = vst [vmem:[%s188 + $0x38] sm:$0xff] %v421
        %438 = vst [vmem:[%s188 + $0x40] sm:$0xff] %v422
        %439 = vst [vmem:[%s188 + $0x48] sm:$0xff] %v423
        %440 = vst [vmem:[%s188 + $0x50] sm:$0xff] %v424
        %441 = vst [vmem:[%s188 + $0x58] sm:$0xff] %v425
        %442 = vst [vmem:[%s188 + $0x60] sm:$0xff] %v426
        %443 = vst [vmem:[%s188 + $0x68] sm:$0xff] %v427
        %444 = vst [vmem:[%s188 + $0x70] sm:$0xff] %v428
        %445 = vst [vmem:[%s188 + $0x78] sm:$0xff] %v429
        %s446 = sand.u32 %s96, 1
        %s447 = scalar_lea.sflag [#allocation4], %s446
        %s448 = sand.u32 %s96, 1
        %s449 = smul.addr %s448, 128
        %s450 = scalar_lea.vmem [#allocation5], %s449
        // Predicated region
        $region37: #{tpu_custom_call.1} parent=31 // pred_check
          %p451 = pneg %p106
        $region38: #{tpu_custom_call.1} parent=31 // pred_check_branch
          %453 = sbr.rel (%p451) target = $region40
        $region39: #{tpu_custom_call.1} parent=31 // pred_region
          %s454 = smul.u32 16, %s20
          %s456 = ssub.s32 2048, 2048
          %457 = vsyncadd %s447, %s456
          %s458 = smul.addr %s454, 128
          %s459 = scalar_lea.hbm %s3, %s458
          %s460 = sshll.u32 %s450, 4
          %s461 = int_to_ptr.vmem [resolvable:$true] %s460
          %466 = dma.vmem_to_hbm [thread:$0]  %s461, 2048, %s459, %s447, 128, 128, 8
        $region40: #{tpu_custom_call.1} parent=31 // pred_fallthru
          _
      $region32: #{tpu_custom_call.1} parent=5 // pred_fallthru
        _
      %p467 = scmp.le.s32.totalorder 2, %s15
      // Predicated region
      $region41: #{tpu_custom_call.1} parent=5 // pred_check
        %p468 = pneg %p467
      $region42: #{tpu_custom_call.1} parent=5 // pred_check_branch
        %470 = sbr.rel (%p468) target = $region44
      $region43: #{tpu_custom_call.1} parent=5 // pred_region
        %s471 = ssub.s32 %s15, 2
        // Predicated region
        $region45: #{tpu_custom_call.1} parent=43 // pred_check
          %p472 = pneg %p112
        $region46: #{tpu_custom_call.1} parent=43 // pred_check_branch
          %474 = sbr.rel (%p472) target = $region48
        $region47: #{tpu_custom_call.1} parent=43 // pred_region
          %s475 = sand.u32 %s97, 1
          %s476 = scalar_lea.sflag [#allocation4], %s475
          %s477 = sand.u32 %s97, 1
          %s478 = smul.addr %s477, 128
          %s479 = scalar_lea.vmem [#allocation5], %s478
          %480 = dma.done %s476, 2048
        $region48: #{tpu_custom_call.1} parent=43 // pred_fallthru
          _
      $region44: #{tpu_custom_call.1} parent=5 // pred_fallthru
        _
    $region6: #{tpu_custom_call.1} parent=1 // loop_footer
      %s19 = sadd.s32 1, %s15
    $region7: #{tpu_custom_call.1} parent=1 // loop_footer_branch
      %14 = sbr.rel target = $region3
    $region8: #{tpu_custom_call.1} parent=1 // loop_exit
      _
    %481 = vsyncpa [#allocation3], 1
    %s482 = scalar_lea.sflag [#allocation3], 1
    %483 = vsyncpa %s482, 1
    %484 = vsyncpa [#allocation4], 1
    %s485 = scalar_lea.sflag [#allocation4], 1
    %486 = vsyncpa %s485, 1

</llo_original>
